<compile_context>
chip_gen: v6e
topology: v6e:2x2x1
jax: 0.10.0
libtpu: 0.0.40
codegen_flags: <defaults>
</compile_context>

<pallas_src>
import functools

import jax
import jax.numpy as jnp
from jax.experimental import pallas as pl
from jax.experimental.pallas import tpu as pltpu


H1 = 256          # fused layer-1 width: 128 (pi1) + 128 (v1)
OUT_LANES = 128   # lane-dense output slab: logits in [:a_dim], value in lane a_dim


# ------------------------------- kernel -------------------------------------
def fused_net_kernel(x_ref, w1_ref, w23_ref, b_ref, out_ref, *, bf16_act):
    """One grid step: (TB, s_dim) bf16 rows -> (TB, 128) f32 output slab."""
    x = x_ref[...]                                    # bf16 (cast in wrapper)
    b = b_ref[...]                                    # (2, H1) f32

    # layer 1 (pi1 | v1) on the MXU, f32 accumulate
    h1 = jnp.dot(x, w1_ref[...], preferred_element_type=jnp.float32)
    h1 = h1 + b[0:1, :]                               # (TB, 256)
    if bf16_act:
        # v6e/v7x: bf16 VPU/EUP -> halve the tanh transcendental work
        h1 = jnp.tanh(h1.astype(jnp.bfloat16))
    else:
        # v5e: no bf16 VPU/EUP -> tanh in f32, cast once for the MXU
        h1 = jnp.tanh(h1).astype(jnp.bfloat16)

    # fused layers 2+3 (no nonlinearity between them in the PyTorch forward)
    out = jnp.dot(h1, w23_ref[...], preferred_element_type=jnp.float32)
    out = out + b[1:2, :OUT_LANES]                    # (TB, 128)
    out_ref[...] = out.astype(out_ref.dtype)


# ------------------------------ parameters ----------------------------------
def make_params(key, s_dim, a_dim, dtype=jnp.float32, random_bias=False):
    """Mimics set_init: weight ~ N(0, 0.1), bias = 0 (weights stored (in, out)).

    random_bias=True is only used by the self-test so the bias path is
    observable (set_init uses zero biases).
    """
    shapes = {
        "pi1": (s_dim, 128),
        "pi2": (128, 64),
        "pi3": (64, a_dim),
        "v1": (s_dim, 128),
        "v2": (128, 64),
        "v3": (64, 1),
    }
    params = {}
    keys = jax.random.split(key, 2 * len(shapes))
    for i, (name, shp) in enumerate(shapes.items()):
        w = 0.1 * jax.random.normal(keys[2 * i], shp, dtype=dtype)
        if random_bias:
            b = 0.1 * jax.random.normal(keys[2 * i + 1], (1, shp[1]), dtype=dtype)
        else:
            b = jnp.zeros((1, shp[1]), dtype=dtype)
        params[name] = (w, b)
    return params


def pack_params(params, a_dim, matmul_dtype=jnp.bfloat16):
    """One-time packing of the 6 Linear layers into 2 fused slabs + 1 bias pack."""
    w_pi1, b_pi1 = params["pi1"]
    w_pi2, b_pi2 = params["pi2"]
    w_pi3, b_pi3 = params["pi3"]
    w_v1, b_v1 = params["v1"]
    w_v2, b_v2 = params["v2"]
    w_v3, b_v3 = params["v3"]
    f32 = jnp.float32

    # layer 1: simple concat along the output dim.
    w1 = jnp.concatenate([w_pi1, w_v1], axis=1)                       # (s_dim, 256)

    # layers 2+3 collapsed in f32 (exact: no activation between them).
    w23_pi = w_pi2.astype(f32) @ w_pi3.astype(f32)                    # (128, a_dim)
    w23_v = w_v2.astype(f32) @ w_v3.astype(f32)                       # (128, 1)
    b23_pi = b_pi2[0].astype(f32) @ w_pi3.astype(f32) + b_pi3[0].astype(f32)
    b23_v = b_v2[0].astype(f32) @ w_v3.astype(f32) + b_v3[0].astype(f32)

    # block-diagonal, lane-padded to 128.
    w23 = jnp.zeros((H1, OUT_LANES), f32)
    w23 = w23.at[:128, :a_dim].set(w23_pi)
    w23 = w23.at[128:, a_dim:a_dim + 1].set(w23_v)                    # (256, 128)

    # biases packed into one (2, 256) f32 array (zero-padded).
    b = jnp.zeros((2, H1), f32)
    b = b.at[0, :].set(jnp.concatenate([b_pi1[0], b_v1[0]]))
    b = b.at[1, :a_dim].set(b23_pi)
    b = b.at[1, a_dim].set(b23_v[0])

    return (w1.astype(matmul_dtype), w23.astype(matmul_dtype), b)


# ------------------------------- wrapper ------------------------------------
def _round_up(n, m):
    return ((n + m - 1) // m) * m


def _device_kind():
    try:
        return jax.devices()[0].device_kind
    except Exception:
        return ""


def _default_bf16_act():
    dk = _device_kind().lower()
    if not dk:
        return False
    return "v5" not in dk          # v5e lacks bf16 VPU/EUP; v6e/v7x have them


def _choose_tile(batch):
    """Returns (tile_rows, padded_batch)."""
    if batch <= 128:
        bp = _round_up(batch, 8)   # sublane alignment; single grid step
        return bp, bp
    dk = _device_kind().lower()
    if "v5" in dk:
        max_tb = 256               # avoid f32 h1 spills with only 1 vst slot
    else:
        max_tb = 512               # single-TC v6e: amortize ~0.35us/step overhead
    if "v7" in dk:
        # 2 TensorCores per chip: keep >=2 balanced parallel grid steps
        tb = min(max_tb, _round_up(pl.cdiv(batch, 2), 128))
    else:
        tb = min(max_tb, _round_up(batch, 128))
    return tb, _round_up(batch, tb)


def net_forward(x, packed, a_dim, *, bf16_act=None):
    """Fused forward: returns (logits (B, a_dim), values (B, 1))."""
    w1, w23, b = packed
    B, s_dim = x.shape
    if bf16_act is None:
        bf16_act = _default_bf16_act()

    # bf16 MXU operands; cast (and pad) once in the wrapper.
    x_bf = x.astype(jnp.bfloat16)
    tb, Bp = _choose_tile(B)
    if Bp != B:
        x_bf = jnp.pad(x_bf, ((0, Bp - B), (0, 0)))
    grid = (Bp // tb,)

    out_slab = pl.pallas_call(
        functools.partial(fused_net_kernel, bf16_act=bf16_act),
        out_shape=jax.ShapeDtypeStruct((Bp, OUT_LANES), jnp.float32),
        grid=grid,
        in_specs=[
            pl.BlockSpec((tb, s_dim), lambda i: (i, 0)),        # x (bf16)
            pl.BlockSpec((s_dim, H1), lambda i: (0, 0)),        # fused W1
            pl.BlockSpec((H1, OUT_LANES), lambda i: (0, 0)),    # fused W2@W3
            pl.BlockSpec((2, H1), lambda i: (0, 0)),            # bias pack
        ],
        out_specs=pl.BlockSpec((tb, OUT_LANES), lambda i: (i, 0)),
        compiler_params=pltpu.CompilerParams(
            dimension_semantics=("parallel",)),
    )(x_bf, w1, w23, b)

    out_slab = out_slab[:B]
    logits = out_slab[:, :a_dim]
    values = out_slab[:, a_dim:a_dim + 1]
    return logits, values


# ----------------------------- references -----------------------------------
def net_forward_ref(x, params):
    """Plain-JAX f32 reference mirroring the PyTorch forward."""
    def lin(h, name):
        w, b = params[name]
        return h @ w + b
    pi1 = jnp.tanh(lin(x, "pi1"))
    logits = lin(lin(pi1, "pi2"), "pi3")
    v1 = jnp.tanh(lin(x, "v1"))
    values = lin(lin(v1, "v2"), "v3")
    return logits, values


def net_forward_packed_ref(x, packed, a_dim, *, bf16_act):
    """Reference matching the kernel's packed / bf16-operand numerics."""
    w1, w23, b = packed
    xb = x.astype(jnp.bfloat16)
    h1 = jnp.dot(xb, w1, preferred_element_type=jnp.float32) + b[0:1, :]
    if bf16_act:
        h1 = jnp.tanh(h1.astype(jnp.bfloat16))
    else:
        h1 = jnp.tanh(h1).astype(jnp.bfloat16)
    out = jnp.dot(h1, w23, preferred_element_type=jnp.float32) + b[1:2, :OUT_LANES]
    return out[:, :a_dim], out[:, a_dim:a_dim + 1]


if __name__ == "__main__":
    S_DIM, A_DIM = 16, 4

    key = jax.random.PRNGKey(0)
    k_params, k_x, k_x2 = jax.random.split(key, 3)

    # random biases so the bias path is actually exercised by the checks
    params = make_params(k_params, S_DIM, A_DIM, random_bias=True)
    packed = pack_params(params, A_DIM)
    bf16_act = _default_bf16_act()

    # --- small per-step batch (single grid point) ---
    B = 8
    x = jax.random.normal(k_x, (B, S_DIM), dtype=jnp.float32)
    logits, values = net_forward(x, packed, A_DIM, bf16_act=bf16_act)
    jax.block_until_ready((logits, values))
    assert logits.shape == (B, A_DIM) and values.shape == (B, 1)

    ml, mv = net_forward_packed_ref(x, packed, A_DIM, bf16_act=bf16_act)
    rl, rv = net_forward_ref(x, params)
    assert jnp.allclose(logits, ml, atol=5e-3, rtol=5e-3)   # matched numerics
    assert jnp.allclose(values, mv, atol=5e-3, rtol=5e-3)
    assert jnp.allclose(logits, rl, atol=5e-2, rtol=5e-2)   # original f32 semantics
    assert jnp.allclose(values, rv, atol=5e-2, rtol=5e-2)

    # --- larger, ragged batch exercising padding + the tiled parallel grid ---
    B2 = 200
    x2 = jax.random.normal(k_x2, (B2, S_DIM), dtype=jnp.float32)
    l2, v2 = net_forward(x2, packed, A_DIM, bf16_act=bf16_act)
    jax.block_until_ready((l2, v2))
    assert l2.shape == (B2, A_DIM) and v2.shape == (B2, 1)
    rl2, rv2 = net_forward_ref(x2, params)
    assert jnp.allclose(l2, rl2, atol=5e-2, rtol=5e-2)
    assert jnp.allclose(v2, rv2, atol=5e-2, rtol=5e-2)

    # TODO(synk): choose_action / loss_func (categorical sampling, softmax loss)
    # are host/training-side utilities and are intentionally not in-kernel.
    print("KERNEL_OK")
</pallas_src>

<mosaic_0001>
module attributes {stable_mosaic.version = 11 : i64} {
  func.func @fused_net_kernel(%arg0: i32, %arg1: memref<8x16xbf16, #tpu.memory_space<vmem>>, %arg2: memref<16x256xbf16, #tpu.memory_space<vmem>>, %arg3: memref<256x128xbf16, #tpu.memory_space<vmem>>, %arg4: memref<2x256xf32, #tpu.memory_space<vmem>>, %arg5: memref<8x128xf32, #tpu.memory_space<vmem>>) attributes {dimension_semantics = [#tpu.dimension_semantics<parallel>], iteration_bounds = array<i64: 1>, scalar_prefetch = 0 : i64, scratch_operands = 0 : i64, tpu.core_type = #tpu.core_type<tc>, window_params = [{transform_indices = @transform_0, window_bounds = array<i64: 8, 16>}, {pipeline_mode = #tpu.pipeline_mode<synchronous>, transform_indices = @transform_1, window_bounds = array<i64: 16, 256>}, {pipeline_mode = #tpu.pipeline_mode<synchronous>, transform_indices = @transform_2, window_bounds = array<i64: 256, 128>}, {pipeline_mode = #tpu.pipeline_mode<synchronous>, transform_indices = @transform_3, window_bounds = array<i64: 2, 256>}, {transform_indices = @transform_4, window_bounds = array<i64: 8, 128>}]} {
    %c0 = arith.constant 0 : index
    %c0_0 = arith.constant 0 : index
    %0 = vector.load %arg1[%c0, %c0_0] : memref<8x16xbf16, #tpu.memory_space<vmem>>, vector<8x16xbf16>
    %c0_1 = arith.constant 0 : index
    %c0_2 = arith.constant 0 : index
    %1 = vector.load %arg4[%c0_1, %c0_2] : memref<2x256xf32, #tpu.memory_space<vmem>>, vector<2x256xf32>
    %c0_3 = arith.constant 0 : index
    %c0_4 = arith.constant 0 : index
    %2 = vector.load %arg2[%c0_3, %c0_4] : memref<16x256xbf16, #tpu.memory_space<vmem>>, vector<16x256xbf16>
    %cst = arith.constant dense<0.000000e+00> : vector<8x256xf32>
    %3 = tpu.matmul %0, %2, %cst {dimension_numbers = #tpu.dot_dimension_numbers<[1], [0], [0], [1], [0, 0, 1, 1], [], []>} : vector<8x16xbf16>, vector<16x256xbf16>, vector<8x256xf32> -> vector<8x256xf32>
    %4 = vector.extract_strided_slice %1 {offsets = [0, 0], sizes = [1, 256], strides = [1, 1]} : vector<2x256xf32> to vector<1x256xf32>
    %5 = vector.broadcast %4 : vector<1x256xf32> to vector<8x256xf32>
    %6 = arith.addf %3, %5 : vector<8x256xf32>
    %7 = arith.truncf %6 : vector<8x256xf32> to vector<8x256xbf16>
    %8 = math.tanh %7 : vector<8x256xbf16>
    %c0_5 = arith.constant 0 : index
    %c0_6 = arith.constant 0 : index
    %9 = vector.load %arg3[%c0_5, %c0_6] : memref<256x128xbf16, #tpu.memory_space<vmem>>, vector<256x128xbf16>
    %cst_7 = arith.constant dense<0.000000e+00> : vector<8x128xf32>
    %10 = tpu.matmul %8, %9, %cst_7 {dimension_numbers = #tpu.dot_dimension_numbers<[1], [0], [0], [1], [0, 0, 1, 1], [], []>} : vector<8x256xbf16>, vector<256x128xbf16>, vector<8x128xf32> -> vector<8x128xf32>
    %11 = vector.extract_strided_slice %1 {offsets = [1, 0], sizes = [1, 128], strides = [1, 1]} : vector<2x256xf32> to vector<1x128xf32>
    %12 = vector.broadcast %11 : vector<1x128xf32> to vector<8x128xf32>
    %13 = arith.addf %10, %12 : vector<8x128xf32>
    %c0_8 = arith.constant 0 : index
    %c0_9 = arith.constant 0 : index
    %14 = vector.load %arg5[%c0_8, %c0_9] : memref<8x128xf32, #tpu.memory_space<vmem>>, vector<8x128xf32>
    tpu.vector_store %arg5[%c0_8, %c0_9], %13 {strides = array<i32>} : memref<8x128xf32, #tpu.memory_space<vmem>>, vector<8x128xf32>,
    return
  }
  func.func @transform_0(%arg0: i32) -> (i32, i32) {
    %c0_i32 = arith.constant 0 : i32
    %c0_i32_0 = arith.constant 0 : i32
    return %arg0, %c0_i32 : i32, i32
  }
  func.func @transform_1(%arg0: i32) -> (i32, i32) {
    %c0_i32 = arith.constant 0 : i32
    %c0_i32_0 = arith.constant 0 : i32
    %c0_i32_1 = arith.constant 0 : i32
    return %c0_i32, %c0_i32_0 : i32, i32
  }
  func.func @transform_2(%arg0: i32) -> (i32, i32) {
    %c0_i32 = arith.constant 0 : i32
    %c0_i32_0 = arith.constant 0 : i32
    %c0_i32_1 = arith.constant 0 : i32
    return %c0_i32, %c0_i32_0 : i32, i32
  }
  func.func @transform_3(%arg0: i32) -> (i32, i32) {
    %c0_i32 = arith.constant 0 : i32
    %c0_i32_0 = arith.constant 0 : i32
    %c0_i32_1 = arith.constant 0 : i32
    return %c0_i32, %c0_i32_0 : i32, i32
  }
  func.func @transform_4(%arg0: i32) -> (i32, i32) {
    %c0_i32 = arith.constant 0 : i32
    %c0_i32_0 = arith.constant 0 : i32
    return %arg0, %c0_i32 : i32, i32
  }
}

</mosaic_0001>

<llo_original>
// kernel: tpu_custom_call.1
$region0: #{tpu_custom_call.1}
  #allocation0 [shape = 'u32[]', space=smem, size = 0x4, offset = 0x4, fixed_abs, tag = 'smem constant byte address 0x4 - core index']
  #allocation1 [shape = 'u32[144,128]{1,0:T(1,128)}', space=vmem, size = 0x12000, scoped, tag = 'internal scratch']
  %s0 = inlined_call_operand.hbm [shape: bf16[8,16], index: 0, kind: input, shape index: {}]
  %s1 = inlined_call_operand.hbm [shape: bf16[16,256], index: 1, kind: input, shape index: {}]
  %s2 = inlined_call_operand.hbm [shape: bf16[256,128], index: 2, kind: input, shape index: {}]
  %s3 = inlined_call_operand.vmem [shape: f32[2,256], index: 3, kind: input, shape index: {}]
  %s4 = inlined_call_operand.hbm [shape: f32[8,128], index: 4, kind: output, shape index: {}]
  %s5 = sld [smem:[#allocation0]]
  $region38: #{tpu_custom_call.1} parent=0
    _
  %s7 = ssub.s32 1, %s5
  %s8 = scalar_select 0, %s7, %s5
  $region1: #{tpu_custom_call.1} parent=0
    #allocation2 [shape = 'u8[2048]{0}', space=vmem, size = 0x800, scoped, tag = 'input window, operand 0, single buffered']
    #allocation3 [shape = 's32[1]{0}', space=sflag, size = 0x4, scoped, tag = 'scoped memory for tpu_custom_call.1']
    #allocation4 [shape = 's32[1]{0}', space=sflag, size = 0x4, scoped, tag = 'scoped memory for tpu_custom_call.1']
    #allocation5 [shape = 'u8[8192]{0}', space=vmem, size = 0x2000, scoped, tag = 'input window, operand 1, single buffered']
    #allocation6 [shape = 's32[1]{0}', space=sflag, size = 0x4, scoped, tag = 'scoped memory for tpu_custom_call.1']
    #allocation7 [shape = 'u8[65536]{0}', space=vmem, size = 0x10000, scoped, tag = 'input window, operand 2, single buffered']
    #allocation8 [shape = 'u8[4096]{0}', space=vmem, size = 0x1000, scoped, tag = 'output window, operand 0, single buffered']
    %9 = vsyncpa [#allocation3], 0
    %10 = vsyncpa [#allocation6], 0
    %11 = vsyncpa [#allocation4], 0
    // Predicated region
    $region2: #{tpu_custom_call.1} parent=1 // pred_check
      _
    $region3: #{tpu_custom_call.1} parent=1 // pred_check_branch
      %13 = sbr.rel (0) target = $region5
    $region4: #{tpu_custom_call.1} parent=1 // pred_region
      %s15 = ssub.s32 64, 64
      %16 = vsyncadd [#allocation3], %s15
      %s18 = sshll.u32 [#allocation2], 4
      %s19 = int_to_ptr.vmem [resolvable:$true] %s18
      %21 = dma.hbm_to_vmem [thread:$0]  %s0, 64, %s19, [#allocation3]
    $region5: #{tpu_custom_call.1} parent=1 // pred_fallthru
      _
    // Predicated region
    $region6: #{tpu_custom_call.1} parent=1 // pred_check
      _
    $region7: #{tpu_custom_call.1} parent=1 // pred_check_branch
      %23 = sbr.rel (0) target = $region9
    $region8: #{tpu_custom_call.1} parent=1 // pred_region
      %s25 = ssub.s32 256, 256
      %26 = vsyncadd [#allocation6], %s25
      %s27 = sshll.u32 [#allocation5], 4
      %s28 = int_to_ptr.vmem [resolvable:$true] %s27
      %33 = dma.hbm_to_vmem [thread:$0]  %s1, 256, %s28, [#allocation6], 128, 128, 8
    $region9: #{tpu_custom_call.1} parent=1 // pred_fallthru
      _
    // Predicated region
    $region10: #{tpu_custom_call.1} parent=1 // pred_check
      _
    $region11: #{tpu_custom_call.1} parent=1 // pred_check_branch
      %35 = sbr.rel (0) target = $region13
    $region12: #{tpu_custom_call.1} parent=1 // pred_region
      %s37 = ssub.s32 2048, 2048
      %38 = vsyncadd [#allocation6], %s37
      %s39 = sshll.u32 [#allocation7], 4
      %s40 = int_to_ptr.vmem [resolvable:$true] %s39
      %45 = dma.hbm_to_vmem [thread:$0]  %s2, 2048, %s40, [#allocation6], 64, 64, 4
    $region13: #{tpu_custom_call.1} parent=1 // pred_fallthru
      _
    // Predicated region
    $region14: #{tpu_custom_call.1} parent=1 // pred_check
      _
    $region15: #{tpu_custom_call.1} parent=1 // pred_check_branch
      %47 = sbr.rel (0) target = $region17
    $region16: #{tpu_custom_call.1} parent=1 // pred_region
      _
    $region17: #{tpu_custom_call.1} parent=1 // pred_fallthru
      _
    // Predicated region
    $region18: #{tpu_custom_call.1} parent=1 // pred_check
      _
    $region19: #{tpu_custom_call.1} parent=1 // pred_check_branch
      %49 = sbr.rel (0) target = $region21
    $region20: #{tpu_custom_call.1} parent=1 // pred_region
      %50 = dma.done [#allocation3], 64
    $region21: #{tpu_custom_call.1} parent=1 // pred_fallthru
      _
    // Predicated region
    $region22: #{tpu_custom_call.1} parent=1 // pred_check
      _
    $region23: #{tpu_custom_call.1} parent=1 // pred_check_branch
      %52 = sbr.rel (0) target = $region25
    $region24: #{tpu_custom_call.1} parent=1 // pred_region
      %53 = dma.done [#allocation6], 256
    $region25: #{tpu_custom_call.1} parent=1 // pred_fallthru
      _
    // Predicated region
    $region26: #{tpu_custom_call.1} parent=1 // pred_check
      _
    $region27: #{tpu_custom_call.1} parent=1 // pred_check_branch
      %55 = sbr.rel (0) target = $region29
    $region28: #{tpu_custom_call.1} parent=1 // pred_region
      %56 = dma.done [#allocation6], 2048
    $region29: #{tpu_custom_call.1} parent=1 // pred_fallthru
      _
    %v58 = vld [vmem:[#allocation2] sm:$0xf]
    %v59 = vld [vmem:[%s3] sm:$0xf]
    %v60 = vld [vmem:[#allocation5] sm:$0xff]
    %v61 = vld [vmem:[#allocation5 + $0x8] sm:$0xff]
    %v63 = vlaneseq
    %v64 = vshrl.u32 %v63, 7
    %v65 = vsub.s32 0, %v64
    %v66 = vrot.slane %v59, %v65
    %v67 = vlaneseq
    %v68 = vshrl.u32 %v67, 7
    %v69 = vsub.s32 2, %v68
    %v70 = vrot.slane %v59, %v69
    %v73 = vlaneseq
    %v74 = vshrl.u32 %v73, 7
    %v75 = vsub.s32 0, %v74
    %v76 = vrot.slane %v66, %v75
    %v77 = vlaneseq
    %v78 = vshrl.u32 %v77, 7
    %v79 = vsub.s32 0, %v78
    %v80 = vrot.slane %v70, %v79
    %v83 = vunpack.c.l.b16 %v60
    %v84 = vunpack.c.h.b16 %v60
    %v85 = vunpack.c.l.b16 %v61
    %v86 = vunpack.c.h.b16 %v61
    %v87 = vpack.c.b16 %v85, %v83
    %v88 = vpack.c.b16 %v86, %v84
    %vm91 = vcmask 130048
    %v93 = vsel %vm91, %v58, 0
    %95 = vmatprep.subr.bf16.mxu0 0
    %96 = vmatpush1.bf16.msra.mxu0 0
    %97 = vmatprep.subr.bf16.mxu0 0
    %98 = vmatpush1.bf16.msra.mxu0 0
    %99 = vmatprep.subr.bf16.mxu0 0
    %100 = vmatpush1.bf16.msra.mxu0 0
    %101 = vmatprep.subr.bf16.mxu0 0
    %102 = vmatpush1.bf16.msra.mxu0 0
    %103 = vmatprep.subr.bf16.mxu0 0
    %104 = vmatpush1.bf16.msra.mxu0 0
    %105 = vmatprep.subr.bf16.mxu0 0
    %106 = vmatpush1.bf16.msra.mxu0 0
    %107 = vmatprep.subr.bf16.mxu0 0
    %108 = vmatpush1.bf16.msra.mxu0 0
    %109 = vmatprep.subr.bf16.mxu0 %v88
    %110 = vmatpush1.bf16.msra.mxu0 %v87
    %111 = vmatprep.subr.bf16.mxu0 0
    %112 = vmatpush2.bf16.msra.mxu0 0
    %113 = vmatprep.subr.bf16.mxu0 0
    %114 = vmatpush2.bf16.msra.mxu0 0
    %115 = vmatprep.subr.bf16.mxu0 0
    %116 = vmatpush2.bf16.msra.mxu0 0
    %117 = vmatprep.subr.bf16.mxu0 0
    %118 = vmatpush2.bf16.msra.mxu0 0
    %119 = vmatprep.subr.bf16.mxu0 0
    %120 = vmatpush2.bf16.msra.mxu0 0
    %121 = vmatprep.subr.bf16.mxu0 0
    %122 = vmatpush2.bf16.msra.mxu0 0
    %123 = vmatprep.subr.bf16.mxu0 0
    %124 = vmatpush2.bf16.msra.mxu0 0
    %125 = vmatprep.subr.bf16.mxu0 0
    %126 = vmatpush2.bf16.msra.mxu0 0
    %127 = vmatprep.mubr.bf16.mxu0 0
    %128 = vmatmul.mubr.bf16.gmra.mxu0 %v93
    %v129 = vpop.f32.mrf.mxu0
    %v130 = vadd.f32 %v76, %v129
    %v131 = vpop.f32.mrf.mxu0
    %v132 = vadd.f32 %v80, %v131
    %v133 = vpop.f32.mrf.mxu0
    %v134 = vpop.f32.mrf.mxu0
    %135 = vdwg.mxu0
    %v136 = vpack.c.bf16 %v130, %v130
    %v137 = vpack.c.bf16 %v132, %v132
    %v138 = vtanh.bf16.pop %v136
    %v139 = vtanh.bf16.pop %v137
    %v140 = vld [vmem:[#allocation7] sm:$0xf]
    %v141 = vld [vmem:[#allocation7 + $0x4] sm:$0xf]
    %v142 = vld [vmem:[#allocation7 + $0x8] sm:$0xf]
    %v143 = vld [vmem:[#allocation7 + $0xc] sm:$0xf]
    %v144 = vld [vmem:[#allocation7 + $0x10] sm:$0xf]
    %v145 = vld [vmem:[#allocation7 + $0x14] sm:$0xf]
    %v146 = vld [vmem:[#allocation7 + $0x18] sm:$0xf]
    %v147 = vld [vmem:[#allocation7 + $0x1c] sm:$0xf]
    %v148 = vld [vmem:[#allocation7 + $0x20] sm:$0xf]
    %v149 = vld [vmem:[#allocation7 + $0x24] sm:$0xf]
    %v150 = vld [vmem:[#allocation7 + $0x28] sm:$0xf]
    %v151 = vld [vmem:[#allocation7 + $0x2c] sm:$0xf]
    %v152 = vld [vmem:[#allocation7 + $0x30] sm:$0xf]
    %v153 = vld [vmem:[#allocation7 + $0x34] sm:$0xf]
    %v154 = vld [vmem:[#allocation7 + $0x38] sm:$0xf]
    %v155 = vld [vmem:[#allocation7 + $0x3c] sm:$0xf]
    %v156 = vld [vmem:[#allocation7 + $0x40] sm:$0xf]
    %v157 = vld [vmem:[#allocation7 + $0x44] sm:$0xf]
    %v158 = vld [vmem:[#allocation7 + $0x48] sm:$0xf]
    %v159 = vld [vmem:[#allocation7 + $0x4c] sm:$0xf]
    %v160 = vld [vmem:[#allocation7 + $0x50] sm:$0xf]
    %v161 = vld [vmem:[#allocation7 + $0x54] sm:$0xf]
    %v162 = vld [vmem:[#allocation7 + $0x58] sm:$0xf]
    %v163 = vld [vmem:[#allocation7 + $0x5c] sm:$0xf]
    %v164 = vld [vmem:[#allocation7 + $0x60] sm:$0xf]
    %v165 = vld [vmem:[#allocation7 + $0x64] sm:$0xf]
    %v166 = vld [vmem:[#allocation7 + $0x68] sm:$0xf]
    %v167 = vld [vmem:[#allocation7 + $0x6c] sm:$0xf]
    %v168 = vld [vmem:[#allocation7 + $0x70] sm:$0xf]
    %v169 = vld [vmem:[#allocation7 + $0x74] sm:$0xf]
    %v170 = vld [vmem:[#allocation7 + $0x78] sm:$0xf]
    %v171 = vld [vmem:[#allocation7 + $0x7c] sm:$0xf]
    %v172 = vlaneseq
    %v173 = vshrl.u32 %v172, 7
    %v174 = vsub.s32 1, %v173
    %v175 = vrot.slane %v59, %v174
    %v208 = vunpack.c.l.b16 %v140
    %v209 = vunpack.c.l.b16 %v141
    %v210 = vunpack.c.l.b16 %v142
    %v211 = vunpack.c.l.b16 %v143
    %v212 = vunpack.c.l.b16 %v144
    %v213 = vunpack.c.l.b16 %v145
    %v214 = vunpack.c.l.b16 %v146
    %v215 = vunpack.c.l.b16 %v147
    %v216 = vunpack.c.l.b16 %v148
    %v217 = vunpack.c.l.b16 %v149
    %v218 = vunpack.c.l.b16 %v150
    %v219 = vunpack.c.l.b16 %v151
    %v220 = vunpack.c.l.b16 %v152
    %v221 = vunpack.c.l.b16 %v153
    %v222 = vunpack.c.l.b16 %v154
    %v223 = vunpack.c.l.b16 %v155
    %v224 = vunpack.c.l.b16 %v156
    %v225 = vunpack.c.l.b16 %v157
    %v226 = vunpack.c.l.b16 %v158
    %v227 = vunpack.c.l.b16 %v159
    %v228 = vunpack.c.l.b16 %v160
    %v229 = vunpack.c.l.b16 %v161
    %v230 = vunpack.c.l.b16 %v162
    %v231 = vunpack.c.l.b16 %v163
    %v232 = vunpack.c.l.b16 %v164
    %v233 = vunpack.c.l.b16 %v165
    %v234 = vunpack.c.l.b16 %v166
    %v235 = vunpack.c.l.b16 %v167
    %v236 = vunpack.c.l.b16 %v168
    %v237 = vunpack.c.l.b16 %v169
    %v238 = vunpack.c.l.b16 %v170
    %v239 = vunpack.c.l.b16 %v171
    %v240 = vpack.c.b16 %v209, %v208
    %v241 = vpack.c.b16 %v211, %v210
    %v242 = vpack.c.b16 %v213, %v212
    %v243 = vpack.c.b16 %v215, %v214
    %v244 = vpack.c.b16 %v217, %v216
    %v245 = vpack.c.b16 %v219, %v218
    %v246 = vpack.c.b16 %v221, %v220
    %v247 = vpack.c.b16 %v223, %v222
    %v248 = vpack.c.b16 %v225, %v224
    %v249 = vpack.c.b16 %v227, %v226
    %v250 = vpack.c.b16 %v229, %v228
    %v251 = vpack.c.b16 %v231, %v230
    %v252 = vpack.c.b16 %v233, %v232
    %v253 = vpack.c.b16 %v235, %v234
    %v254 = vpack.c.b16 %v237, %v236
    %v255 = vpack.c.b16 %v239, %v238
    %272 = vmatprep.subr.bf16.mxu0 0
    %273 = vmatpush1.bf16.msra.mxu0 %v247
    %274 = vmatprep.subr.bf16.mxu0 0
    %275 = vmatpush1.bf16.msra.mxu0 %v246
    %276 = vmatprep.subr.bf16.mxu0 0
    %277 = vmatpush1.bf16.msra.mxu0 %v245
    %278 = vmatprep.subr.bf16.mxu0 0
    %279 = vmatpush1.bf16.msra.mxu0 %v244
    %280 = vmatprep.subr.bf16.mxu0 0
    %281 = vmatpush1.bf16.msra.mxu0 %v243
    %282 = vmatprep.subr.bf16.mxu0 0
    %283 = vmatpush1.bf16.msra.mxu0 %v242
    %284 = vmatprep.subr.bf16.mxu0 0
    %285 = vmatpush1.bf16.msra.mxu0 %v241
    %286 = vmatprep.subr.bf16.mxu0 0
    %287 = vmatpush1.bf16.msra.mxu0 %v240
    %288 = vmatprep.subr.bf16.mxu0 0
    %289 = vmatpush2.bf16.msra.mxu0 %v255
    %290 = vmatprep.subr.bf16.mxu0 0
    %291 = vmatpush2.bf16.msra.mxu0 %v254
    %292 = vmatprep.subr.bf16.mxu0 0
    %293 = vmatpush2.bf16.msra.mxu0 %v253
    %294 = vmatprep.subr.bf16.mxu0 0
    %295 = vmatpush2.bf16.msra.mxu0 %v252
    %296 = vmatprep.subr.bf16.mxu0 0
    %297 = vmatpush2.bf16.msra.mxu0 %v251
    %298 = vmatprep.subr.bf16.mxu0 0
    %299 = vmatpush2.bf16.msra.mxu0 %v250
    %300 = vmatprep.subr.bf16.mxu0 0
    %301 = vmatpush2.bf16.msra.mxu0 %v249
    %302 = vmatprep.subr.bf16.mxu0 0
    %303 = vmatpush2.bf16.msra.mxu0 %v248
    %304 = vmatprep.mubr.bf16.mxu0 %v139
    %305 = vmatmul.mubr.bf16.gmra.mxu0 %v138
    %v306 = vpop.f32.mrf.mxu0
    %v307 = vadd.f32 %v175, %v306
    %v308 = vpop.f32.mrf.mxu0
    %v309 = vpop.f32.mrf.mxu0
    %v310 = vpop.f32.mrf.mxu0
    %311 = vdwg.mxu0
    %312 = vst [vmem:[#allocation8] sm:$0xff] %v307
    // Predicated region
    $region30: #{tpu_custom_call.1} parent=1 // pred_check
      _
    $region31: #{tpu_custom_call.1} parent=1 // pred_check_branch
      %314 = sbr.rel (0) target = $region33
    $region32: #{tpu_custom_call.1} parent=1 // pred_region
      %s316 = ssub.s32 128, 128
      %317 = vsyncadd [#allocation4], %s316
      %s319 = sshll.u32 [#allocation8], 4
      %s320 = int_to_ptr.vmem [resolvable:$true] %s319
      %322 = dma.vmem_to_hbm [thread:$0]  %s320, 128, %s4, [#allocation4]
    $region33: #{tpu_custom_call.1} parent=1 // pred_fallthru
      _
    // Predicated region
    $region34: #{tpu_custom_call.1} parent=1 // pred_check
      _
    $region35: #{tpu_custom_call.1} parent=1 // pred_check_branch
      %324 = sbr.rel (0) target = $region37
    $region36: #{tpu_custom_call.1} parent=1 // pred_region
      %325 = dma.done [#allocation4], 128
    $region37: #{tpu_custom_call.1} parent=1 // pred_fallthru
      _
    %326 = vsyncpa [#allocation3], 1
    %327 = vsyncpa [#allocation6], 1
    %328 = vsyncpa [#allocation4], 1

</llo_original>
